<compile_context>
chip_gen: v7x
topology: tpu7x:2x2x1
jax: 0.10.0
libtpu: 0.0.40
codegen_flags: <defaults>
</compile_context>

<pallas_src>
import functools

import jax
import jax.numpy as jnp
from jax.experimental import pallas as pl
from jax.experimental.pallas import tpu as pltpu


def _final_conv_kernel(w_ref, b_ref, x_ref, o_ref):
    """1x1-conv tile: unrolled VPU MAC over channels, spatial on (sublane, lane).

    w_ref: SMEM (C_out, C_in)       scalar weights
    b_ref: SMEM (C_out,)            scalar biases
    x_ref: VMEM (1, C_in, S, 128)   input tile  (S*128 spatial positions)
    o_ref: VMEM (1, C_out, S, 128)  output tile
    """
    c_in = x_ref.shape[1]
    c_out = o_ref.shape[1]

    # (C_in, S, 128): channel is a major axis -> x[ci] is a dense vreg group.
    x = x_ref[0].astype(jnp.float32)

    # Tiny static channel counts -> fully unrolled scalar*vector FMAs on the
    # VPU.  (For large C_in/C_out an MXU jnp.dot path would be preferable; not
    # needed here where num_classes=5 and in_channel is small.)
    for co in range(c_out):
        acc = x[0] * w_ref[co, 0]
        for ci in range(1, c_in):
            acc = acc + x[ci] * w_ref[co, ci]
        # Dense (S, 128) store — co indexes a major axis, no sublane masking.
        o_ref[0, co] = (acc + b_ref[co]).astype(o_ref.dtype)


@functools.partial(jax.jit, static_argnames=("max_rows",))
def final_conv(x_nchw, weight, bias, *, max_rows=64):
    """1x1 conv (FinalConv.forward).

    x_nchw: (N, C_in, H, W)
    weight: (C_out, C_in) or (C_out, C_in, 1, 1)  (PyTorch Conv2d layout)
    bias:   (C_out,)
    max_rows: spatial sublane-rows per tile (multiple of 8); tile = max_rows*128.
    """
    assert max_rows % 8 == 0
    n, c_in, h, w_sp = x_nchw.shape
    c_out = weight.shape[0]
    weight2d = weight.reshape(c_out, c_in)

    lanes = 128
    hw = h * w_sp
    rows_total = -(-hw // lanes)          # ceil(HW / 128)
    if rows_total <= max_rows:
        tile_rows = rows_total            # single spatial tile; full-dim OK
    else:
        tile_rows = max_rows              # multiple of 8
        rows_total = -(-rows_total // tile_rows) * tile_rows
    hw_pad = rows_total * lanes

    # Free reshapes: NCHW -> (N, C, HW) -> (N, C, rows, 128). Pad spatial tail.
    x_flat = x_nchw.reshape(n, c_in, hw)
    if hw_pad != hw:
        x_flat = jnp.pad(x_flat, ((0, 0), (0, 0), (0, hw_pad - hw)))
    x4 = x_flat.reshape(n, c_in, rows_total, lanes)

    grid = (n, rows_total // tile_rows)

    out4 = pl.pallas_call(
        _final_conv_kernel,
        out_shape=jax.ShapeDtypeStruct((n, c_out, rows_total, lanes), x_nchw.dtype),
        grid_spec=pltpu.PrefetchScalarGridSpec(
            num_scalar_prefetch=0,
            grid=grid,
            in_specs=[
                # Tiny parameter tables live in SMEM; read as scalars in-kernel.
                pl.BlockSpec(memory_space=pltpu.MemorySpace.SMEM),   # weight (C_out, C_in)
                pl.BlockSpec(memory_space=pltpu.MemorySpace.SMEM),   # bias   (C_out,)
                pl.BlockSpec((1, c_in, tile_rows, lanes),
                             lambda ni, si: (ni, 0, si, 0)),
            ],
            out_specs=pl.BlockSpec((1, c_out, tile_rows, lanes),
                                   lambda ni, si: (ni, 0, si, 0)),
        ),
        compiler_params=pltpu.CompilerParams(
            dimension_semantics=("parallel", "parallel")),
    )(weight2d, bias, x4)

    # Drop spatial padding; output is already NCHW-ordered.
    out_flat = out4.reshape(n, c_out, hw_pad)[:, :, :hw]
    return out_flat.reshape(n, c_out, h, w_sp)


if __name__ == "__main__":
    # Small shapes consistent with the module: batch=2, in_channel=4,
    # spatial=16x16, num_classes=5.
    N, C_IN, H, W = 2, 4, 16, 16
    NUM_CLASSES = 5

    key = jax.random.PRNGKey(0)
    kx, kw, kb = jax.random.split(key, 3)

    x = jax.random.normal(kx, (N, C_IN, H, W), dtype=jnp.float32)
    # Conv2d 1x1 params in PyTorch layout: weight (C_out, C_in, 1, 1), bias (C_out,).
    weight = jax.random.normal(kw, (NUM_CLASSES, C_IN, 1, 1), dtype=jnp.float32) * 0.1
    bias = jax.random.normal(kb, (NUM_CLASSES,), dtype=jnp.float32) * 0.1

    out = final_conv(x, weight, bias)
    jax.block_until_ready(out)

    # Reference check: 1x1 conv == channel contraction.
    w2d = weight.reshape(NUM_CLASSES, C_IN)
    ref = jnp.einsum("nchw,oc->nohw", x, w2d) + bias[None, :, None, None]
    assert out.shape == (N, NUM_CLASSES, H, W), out.shape
    assert jnp.allclose(out, ref, atol=1e-5, rtol=1e-5), "mismatch vs reference"

    print("KERNEL_OK")
</pallas_src>

<mosaic_0001>
module attributes {stable_mosaic.version = 11 : i64} {
  func.func @_final_conv_kernel(%arg0: i32, %arg1: i32, %arg2: memref<5x4xf32, #tpu.memory_space<smem>>, %arg3: memref<5xf32, #tpu.memory_space<smem>>, %arg4: memref<1x4x2x128xf32, #tpu.memory_space<vmem>>, %arg5: memref<1x5x2x128xf32, #tpu.memory_space<vmem>>) attributes {dimension_semantics = [#tpu.dimension_semantics<parallel>, #tpu.dimension_semantics<parallel>], iteration_bounds = array<i64: 2, 1>, scalar_prefetch = 0 : i64, scratch_operands = 0 : i64, tpu.core_type = #tpu.core_type<tc>, window_params = [{transform_indices = @transform_0, window_bounds = array<i64: 5, 4>}, {transform_indices = @transform_1, window_bounds = array<i64: 5>}, {transform_indices = @transform_2, window_bounds = array<i64: 1, 4, 2, 128>}, {transform_indices = @transform_3, window_bounds = array<i64: 1, 5, 2, 128>}]} {
    %c0 = arith.constant 0 : index
    %c0_0 = arith.constant 0 : index
    %c0_1 = arith.constant 0 : index
    %c0_2 = arith.constant 0 : index
    %0 = vector.load %arg4[%c0, %c0_0, %c0_1, %c0_2] : memref<1x4x2x128xf32, #tpu.memory_space<vmem>>, vector<1x4x2x128xf32>
    %1 = vector.shape_cast %0 : vector<1x4x2x128xf32> to vector<4x2x128xf32>
    %2 = vector.extract_strided_slice %1 {offsets = [0, 0, 0], sizes = [1, 2, 128], strides = [1, 1, 1]} : vector<4x2x128xf32> to vector<1x2x128xf32>
    %3 = vector.shape_cast %2 : vector<1x2x128xf32> to vector<2x128xf32>
    %c0_3 = arith.constant 0 : index
    %c0_4 = arith.constant 0 : index
    %4 = memref.load %arg2[%c0_3, %c0_4] : memref<5x4xf32, #tpu.memory_space<smem>>
    %5 = vector.broadcast %4 : f32 to vector<2x128xf32>
    %6 = arith.mulf %3, %5 : vector<2x128xf32>
    %7 = vector.extract_strided_slice %1 {offsets = [1, 0, 0], sizes = [1, 2, 128], strides = [1, 1, 1]} : vector<4x2x128xf32> to vector<1x2x128xf32>
    %8 = vector.shape_cast %7 : vector<1x2x128xf32> to vector<2x128xf32>
    %c0_5 = arith.constant 0 : index
    %c1 = arith.constant 1 : index
    %9 = memref.load %arg2[%c0_5, %c1] : memref<5x4xf32, #tpu.memory_space<smem>>
    %10 = vector.broadcast %9 : f32 to vector<2x128xf32>
    %11 = arith.mulf %8, %10 : vector<2x128xf32>
    %12 = arith.addf %6, %11 : vector<2x128xf32>
    %13 = vector.extract_strided_slice %1 {offsets = [2, 0, 0], sizes = [1, 2, 128], strides = [1, 1, 1]} : vector<4x2x128xf32> to vector<1x2x128xf32>
    %14 = vector.shape_cast %13 : vector<1x2x128xf32> to vector<2x128xf32>
    %c0_6 = arith.constant 0 : index
    %c2 = arith.constant 2 : index
    %15 = memref.load %arg2[%c0_6, %c2] : memref<5x4xf32, #tpu.memory_space<smem>>
    %16 = vector.broadcast %15 : f32 to vector<2x128xf32>
    %17 = arith.mulf %14, %16 : vector<2x128xf32>
    %18 = arith.addf %12, %17 : vector<2x128xf32>
    %19 = vector.extract_strided_slice %1 {offsets = [3, 0, 0], sizes = [1, 2, 128], strides = [1, 1, 1]} : vector<4x2x128xf32> to vector<1x2x128xf32>
    %20 = vector.shape_cast %19 : vector<1x2x128xf32> to vector<2x128xf32>
    %c0_7 = arith.constant 0 : index
    %c3 = arith.constant 3 : index
    %21 = memref.load %arg2[%c0_7, %c3] : memref<5x4xf32, #tpu.memory_space<smem>>
    %22 = vector.broadcast %21 : f32 to vector<2x128xf32>
    %23 = arith.mulf %20, %22 : vector<2x128xf32>
    %24 = arith.addf %18, %23 : vector<2x128xf32>
    %c0_8 = arith.constant 0 : index
    %25 = memref.load %arg3[%c0_8] : memref<5xf32, #tpu.memory_space<smem>>
    %26 = vector.broadcast %25 : f32 to vector<2x128xf32>
    %27 = arith.addf %24, %26 : vector<2x128xf32>
    %c0_9 = arith.constant 0 : index
    %c0_10 = arith.constant 0 : index
    %c0_11 = arith.constant 0 : index
    %c0_12 = arith.constant 0 : index
    %28 = vector.load %arg5[%c0_9, %c0_10, %c0_11, %c0_12] : memref<1x5x2x128xf32, #tpu.memory_space<vmem>>, vector<1x1x2x128xf32>
    %29 = vector.shape_cast %28 : vector<1x1x2x128xf32> to vector<2x128xf32>
    %30 = vector.shape_cast %27 : vector<2x128xf32> to vector<1x1x2x128xf32>
    tpu.vector_store %arg5[%c0_9, %c0_10, %c0_11, %c0_12], %30 {strides = array<i32>} : memref<1x5x2x128xf32, #tpu.memory_space<vmem>>, vector<1x1x2x128xf32>,
    %31 = vector.extract_strided_slice %1 {offsets = [0, 0, 0], sizes = [1, 2, 128], strides = [1, 1, 1]} : vector<4x2x128xf32> to vector<1x2x128xf32>
    %32 = vector.shape_cast %31 : vector<1x2x128xf32> to vector<2x128xf32>
    %c1_13 = arith.constant 1 : index
    %c0_14 = arith.constant 0 : index
    %33 = memref.load %arg2[%c1_13, %c0_14] : memref<5x4xf32, #tpu.memory_space<smem>>
    %34 = vector.broadcast %33 : f32 to vector<2x128xf32>
    %35 = arith.mulf %32, %34 : vector<2x128xf32>
    %36 = vector.extract_strided_slice %1 {offsets = [1, 0, 0], sizes = [1, 2, 128], strides = [1, 1, 1]} : vector<4x2x128xf32> to vector<1x2x128xf32>
    %37 = vector.shape_cast %36 : vector<1x2x128xf32> to vector<2x128xf32>
    %c1_15 = arith.constant 1 : index
    %c1_16 = arith.constant 1 : index
    %38 = memref.load %arg2[%c1_15, %c1_16] : memref<5x4xf32, #tpu.memory_space<smem>>
    %39 = vector.broadcast %38 : f32 to vector<2x128xf32>
    %40 = arith.mulf %37, %39 : vector<2x128xf32>
    %41 = arith.addf %35, %40 : vector<2x128xf32>
    %42 = vector.extract_strided_slice %1 {offsets = [2, 0, 0], sizes = [1, 2, 128], strides = [1, 1, 1]} : vector<4x2x128xf32> to vector<1x2x128xf32>
    %43 = vector.shape_cast %42 : vector<1x2x128xf32> to vector<2x128xf32>
    %c1_17 = arith.constant 1 : index
    %c2_18 = arith.constant 2 : index
    %44 = memref.load %arg2[%c1_17, %c2_18] : memref<5x4xf32, #tpu.memory_space<smem>>
    %45 = vector.broadcast %44 : f32 to vector<2x128xf32>
    %46 = arith.mulf %43, %45 : vector<2x128xf32>
    %47 = arith.addf %41, %46 : vector<2x128xf32>
    %48 = vector.extract_strided_slice %1 {offsets = [3, 0, 0], sizes = [1, 2, 128], strides = [1, 1, 1]} : vector<4x2x128xf32> to vector<1x2x128xf32>
    %49 = vector.shape_cast %48 : vector<1x2x128xf32> to vector<2x128xf32>
    %c1_19 = arith.constant 1 : index
    %c3_20 = arith.constant 3 : index
    %50 = memref.load %arg2[%c1_19, %c3_20] : memref<5x4xf32, #tpu.memory_space<smem>>
    %51 = vector.broadcast %50 : f32 to vector<2x128xf32>
    %52 = arith.mulf %49, %51 : vector<2x128xf32>
    %53 = arith.addf %47, %52 : vector<2x128xf32>
    %c1_21 = arith.constant 1 : index
    %54 = memref.load %arg3[%c1_21] : memref<5xf32, #tpu.memory_space<smem>>
    %55 = vector.broadcast %54 : f32 to vector<2x128xf32>
    %56 = arith.addf %53, %55 : vector<2x128xf32>
    %c0_22 = arith.constant 0 : index
    %c1_23 = arith.constant 1 : index
    %c0_24 = arith.constant 0 : index
    %c0_25 = arith.constant 0 : index
    %57 = vector.load %arg5[%c0_22, %c1_23, %c0_24, %c0_25] : memref<1x5x2x128xf32, #tpu.memory_space<vmem>>, vector<1x1x2x128xf32>
    %58 = vector.shape_cast %57 : vector<1x1x2x128xf32> to vector<2x128xf32>
    %59 = vector.shape_cast %56 : vector<2x128xf32> to vector<1x1x2x128xf32>
    tpu.vector_store %arg5[%c0_22, %c1_23, %c0_24, %c0_25], %59 {strides = array<i32>} : memref<1x5x2x128xf32, #tpu.memory_space<vmem>>, vector<1x1x2x128xf32>,
    %60 = vector.extract_strided_slice %1 {offsets = [0, 0, 0], sizes = [1, 2, 128], strides = [1, 1, 1]} : vector<4x2x128xf32> to vector<1x2x128xf32>
    %61 = vector.shape_cast %60 : vector<1x2x128xf32> to vector<2x128xf32>
    %c2_26 = arith.constant 2 : index
    %c0_27 = arith.constant 0 : index
    %62 = memref.load %arg2[%c2_26, %c0_27] : memref<5x4xf32, #tpu.memory_space<smem>>
    %63 = vector.broadcast %62 : f32 to vector<2x128xf32>
    %64 = arith.mulf %61, %63 : vector<2x128xf32>
    %65 = vector.extract_strided_slice %1 {offsets = [1, 0, 0], sizes = [1, 2, 128], strides = [1, 1, 1]} : vector<4x2x128xf32> to vector<1x2x128xf32>
    %66 = vector.shape_cast %65 : vector<1x2x128xf32> to vector<2x128xf32>
    %c2_28 = arith.constant 2 : index
    %c1_29 = arith.constant 1 : index
    %67 = memref.load %arg2[%c2_28, %c1_29] : memref<5x4xf32, #tpu.memory_space<smem>>
    %68 = vector.broadcast %67 : f32 to vector<2x128xf32>
    %69 = arith.mulf %66, %68 : vector<2x128xf32>
    %70 = arith.addf %64, %69 : vector<2x128xf32>
    %71 = vector.extract_strided_slice %1 {offsets = [2, 0, 0], sizes = [1, 2, 128], strides = [1, 1, 1]} : vector<4x2x128xf32> to vector<1x2x128xf32>
    %72 = vector.shape_cast %71 : vector<1x2x128xf32> to vector<2x128xf32>
    %c2_30 = arith.constant 2 : index
    %c2_31 = arith.constant 2 : index
    %73 = memref.load %arg2[%c2_30, %c2_31] : memref<5x4xf32, #tpu.memory_space<smem>>
    %74 = vector.broadcast %73 : f32 to vector<2x128xf32>
    %75 = arith.mulf %72, %74 : vector<2x128xf32>
    %76 = arith.addf %70, %75 : vector<2x128xf32>
    %77 = vector.extract_strided_slice %1 {offsets = [3, 0, 0], sizes = [1, 2, 128], strides = [1, 1, 1]} : vector<4x2x128xf32> to vector<1x2x128xf32>
    %78 = vector.shape_cast %77 : vector<1x2x128xf32> to vector<2x128xf32>
    %c2_32 = arith.constant 2 : index
    %c3_33 = arith.constant 3 : index
    %79 = memref.load %arg2[%c2_32, %c3_33] : memref<5x4xf32, #tpu.memory_space<smem>>
    %80 = vector.broadcast %79 : f32 to vector<2x128xf32>
    %81 = arith.mulf %78, %80 : vector<2x128xf32>
    %82 = arith.addf %76, %81 : vector<2x128xf32>
    %c2_34 = arith.constant 2 : index
    %83 = memref.load %arg3[%c2_34] : memref<5xf32, #tpu.memory_space<smem>>
    %84 = vector.broadcast %83 : f32 to vector<2x128xf32>
    %85 = arith.addf %82, %84 : vector<2x128xf32>
    %c0_35 = arith.constant 0 : index
    %c2_36 = arith.constant 2 : index
    %c0_37 = arith.constant 0 : index
    %c0_38 = arith.constant 0 : index
    %86 = vector.load %arg5[%c0_35, %c2_36, %c0_37, %c0_38] : memref<1x5x2x128xf32, #tpu.memory_space<vmem>>, vector<1x1x2x128xf32>
    %87 = vector.shape_cast %86 : vector<1x1x2x128xf32> to vector<2x128xf32>
    %88 = vector.shape_cast %85 : vector<2x128xf32> to vector<1x1x2x128xf32>
    tpu.vector_store %arg5[%c0_35, %c2_36, %c0_37, %c0_38], %88 {strides = array<i32>} : memref<1x5x2x128xf32, #tpu.memory_space<vmem>>, vector<1x1x2x128xf32>,
    %89 = vector.extract_strided_slice %1 {offsets = [0, 0, 0], sizes = [1, 2, 128], strides = [1, 1, 1]} : vector<4x2x128xf32> to vector<1x2x128xf32>
    %90 = vector.shape_cast %89 : vector<1x2x128xf32> to vector<2x128xf32>
    %c3_39 = arith.constant 3 : index
    %c0_40 = arith.constant 0 : index
    %91 = memref.load %arg2[%c3_39, %c0_40] : memref<5x4xf32, #tpu.memory_space<smem>>
    %92 = vector.broadcast %91 : f32 to vector<2x128xf32>
    %93 = arith.mulf %90, %92 : vector<2x128xf32>
    %94 = vector.extract_strided_slice %1 {offsets = [1, 0, 0], sizes = [1, 2, 128], strides = [1, 1, 1]} : vector<4x2x128xf32> to vector<1x2x128xf32>
    %95 = vector.shape_cast %94 : vector<1x2x128xf32> to vector<2x128xf32>
    %c3_41 = arith.constant 3 : index
    %c1_42 = arith.constant 1 : index
    %96 = memref.load %arg2[%c3_41, %c1_42] : memref<5x4xf32, #tpu.memory_space<smem>>
    %97 = vector.broadcast %96 : f32 to vector<2x128xf32>
    %98 = arith.mulf %95, %97 : vector<2x128xf32>
    %99 = arith.addf %93, %98 : vector<2x128xf32>
    %100 = vector.extract_strided_slice %1 {offsets = [2, 0, 0], sizes = [1, 2, 128], strides = [1, 1, 1]} : vector<4x2x128xf32> to vector<1x2x128xf32>
    %101 = vector.shape_cast %100 : vector<1x2x128xf32> to vector<2x128xf32>
    %c3_43 = arith.constant 3 : index
    %c2_44 = arith.constant 2 : index
    %102 = memref.load %arg2[%c3_43, %c2_44] : memref<5x4xf32, #tpu.memory_space<smem>>
    %103 = vector.broadcast %102 : f32 to vector<2x128xf32>
    %104 = arith.mulf %101, %103 : vector<2x128xf32>
    %105 = arith.addf %99, %104 : vector<2x128xf32>
    %106 = vector.extract_strided_slice %1 {offsets = [3, 0, 0], sizes = [1, 2, 128], strides = [1, 1, 1]} : vector<4x2x128xf32> to vector<1x2x128xf32>
    %107 = vector.shape_cast %106 : vector<1x2x128xf32> to vector<2x128xf32>
    %c3_45 = arith.constant 3 : index
    %c3_46 = arith.constant 3 : index
    %108 = memref.load %arg2[%c3_45, %c3_46] : memref<5x4xf32, #tpu.memory_space<smem>>
    %109 = vector.broadcast %108 : f32 to vector<2x128xf32>
    %110 = arith.mulf %107, %109 : vector<2x128xf32>
    %111 = arith.addf %105, %110 : vector<2x128xf32>
    %c3_47 = arith.constant 3 : index
    %112 = memref.load %arg3[%c3_47] : memref<5xf32, #tpu.memory_space<smem>>
    %113 = vector.broadcast %112 : f32 to vector<2x128xf32>
    %114 = arith.addf %111, %113 : vector<2x128xf32>
    %c0_48 = arith.constant 0 : index
    %c3_49 = arith.constant 3 : index
    %c0_50 = arith.constant 0 : index
    %c0_51 = arith.constant 0 : index
    %115 = vector.load %arg5[%c0_48, %c3_49, %c0_50, %c0_51] : memref<1x5x2x128xf32, #tpu.memory_space<vmem>>, vector<1x1x2x128xf32>
    %116 = vector.shape_cast %115 : vector<1x1x2x128xf32> to vector<2x128xf32>
    %117 = vector.shape_cast %114 : vector<2x128xf32> to vector<1x1x2x128xf32>
    tpu.vector_store %arg5[%c0_48, %c3_49, %c0_50, %c0_51], %117 {strides = array<i32>} : memref<1x5x2x128xf32, #tpu.memory_space<vmem>>, vector<1x1x2x128xf32>,
    %118 = vector.extract_strided_slice %1 {offsets = [0, 0, 0], sizes = [1, 2, 128], strides = [1, 1, 1]} : vector<4x2x128xf32> to vector<1x2x128xf32>
    %119 = vector.shape_cast %118 : vector<1x2x128xf32> to vector<2x128xf32>
    %c4 = arith.constant 4 : index
    %c0_52 = arith.constant 0 : index
    %120 = memref.load %arg2[%c4, %c0_52] : memref<5x4xf32, #tpu.memory_space<smem>>
    %121 = vector.broadcast %120 : f32 to vector<2x128xf32>
    %122 = arith.mulf %119, %121 : vector<2x128xf32>
    %123 = vector.extract_strided_slice %1 {offsets = [1, 0, 0], sizes = [1, 2, 128], strides = [1, 1, 1]} : vector<4x2x128xf32> to vector<1x2x128xf32>
    %124 = vector.shape_cast %123 : vector<1x2x128xf32> to vector<2x128xf32>
    %c4_53 = arith.constant 4 : index
    %c1_54 = arith.constant 1 : index
    %125 = memref.load %arg2[%c4_53, %c1_54] : memref<5x4xf32, #tpu.memory_space<smem>>
    %126 = vector.broadcast %125 : f32 to vector<2x128xf32>
    %127 = arith.mulf %124, %126 : vector<2x128xf32>
    %128 = arith.addf %122, %127 : vector<2x128xf32>
    %129 = vector.extract_strided_slice %1 {offsets = [2, 0, 0], sizes = [1, 2, 128], strides = [1, 1, 1]} : vector<4x2x128xf32> to vector<1x2x128xf32>
    %130 = vector.shape_cast %129 : vector<1x2x128xf32> to vector<2x128xf32>
    %c4_55 = arith.constant 4 : index
    %c2_56 = arith.constant 2 : index
    %131 = memref.load %arg2[%c4_55, %c2_56] : memref<5x4xf32, #tpu.memory_space<smem>>
    %132 = vector.broadcast %131 : f32 to vector<2x128xf32>
    %133 = arith.mulf %130, %132 : vector<2x128xf32>
    %134 = arith.addf %128, %133 : vector<2x128xf32>
    %135 = vector.extract_strided_slice %1 {offsets = [3, 0, 0], sizes = [1, 2, 128], strides = [1, 1, 1]} : vector<4x2x128xf32> to vector<1x2x128xf32>
    %136 = vector.shape_cast %135 : vector<1x2x128xf32> to vector<2x128xf32>
    %c4_57 = arith.constant 4 : index
    %c3_58 = arith.constant 3 : index
    %137 = memref.load %arg2[%c4_57, %c3_58] : memref<5x4xf32, #tpu.memory_space<smem>>
    %138 = vector.broadcast %137 : f32 to vector<2x128xf32>
    %139 = arith.mulf %136, %138 : vector<2x128xf32>
    %140 = arith.addf %134, %139 : vector<2x128xf32>
    %c4_59 = arith.constant 4 : index
    %141 = memref.load %arg3[%c4_59] : memref<5xf32, #tpu.memory_space<smem>>
    %142 = vector.broadcast %141 : f32 to vector<2x128xf32>
    %143 = arith.addf %140, %142 : vector<2x128xf32>
    %c0_60 = arith.constant 0 : index
    %c4_61 = arith.constant 4 : index
    %c0_62 = arith.constant 0 : index
    %c0_63 = arith.constant 0 : index
    %144 = vector.load %arg5[%c0_60, %c4_61, %c0_62, %c0_63] : memref<1x5x2x128xf32, #tpu.memory_space<vmem>>, vector<1x1x2x128xf32>
    %145 = vector.shape_cast %144 : vector<1x1x2x128xf32> to vector<2x128xf32>
    %146 = vector.shape_cast %143 : vector<2x128xf32> to vector<1x1x2x128xf32>
    tpu.vector_store %arg5[%c0_60, %c4_61, %c0_62, %c0_63], %146 {strides = array<i32>} : memref<1x5x2x128xf32, #tpu.memory_space<vmem>>, vector<1x1x2x128xf32>,
    return
  }
  func.func @transform_0(%arg0: i32, %arg1: i32) -> (i32, i32) {
    %c0_i32 = arith.constant 0 : i32
    %c0_i32_0 = arith.constant 0 : i32
    %c0_i32_1 = arith.constant 0 : i32
    return %c0_i32, %c0_i32_0 : i32, i32
  }
  func.func @transform_1(%arg0: i32, %arg1: i32) -> i32 {
    %c0_i32 = arith.constant 0 : i32
    %c0_i32_0 = arith.constant 0 : i32
    return %c0_i32 : i32
  }
  func.func @transform_2(%arg0: i32, %arg1: i32) -> (i32, i32, i32, i32) {
    %c0_i32 = arith.constant 0 : i32
    %c0_i32_0 = arith.constant 0 : i32
    %c0_i32_1 = arith.constant 0 : i32
    return %arg0, %c0_i32, %arg1, %c0_i32_0 : i32, i32, i32, i32
  }
  func.func @transform_3(%arg0: i32, %arg1: i32) -> (i32, i32, i32, i32) {
    %c0_i32 = arith.constant 0 : i32
    %c0_i32_0 = arith.constant 0 : i32
    %c0_i32_1 = arith.constant 0 : i32
    return %arg0, %c0_i32, %arg1, %c0_i32_0 : i32, i32, i32, i32
  }
}

</mosaic_0001>

<llo_original>
// kernel: final_conv.1
$region0: #{final_conv.1}
  #allocation0 [shape = 'u32[]', space=smem, size = 0x4, offset = 0x4, fixed_abs, tag = 'smem constant byte address 0x4 - core index']
  #allocation1 [shape = 'u32[144,128]{1,0:T(1,128)}', space=vmem, size = 0x12000, scoped, tag = 'internal scratch']
  %s0 = inlined_call_operand.vmem [shape: f32[5,4], index: 0, kind: input, shape index: {}]
  %s1 = inlined_call_operand.vmem [shape: f32[5], index: 1, kind: input, shape index: {}]
  %s2 = inlined_call_operand.vmem [shape: f32[2,4,2,128], index: 2, kind: input, shape index: {}]
  %s3 = inlined_call_operand.vmem [shape: f32[2,5,2,128], index: 3, kind: output, shape index: {}]
  %s4 = sld [smem:[#allocation0]]
  $region53: #{final_conv.1} parent=0
    _
  %s6 = ssub.s32 1, %s4
  %s7 = scalar_select 0, %s6, %s4
  $region1: #{final_conv.1} parent=0
    #allocation2 [shape = 'u8[4096]{0}', space=smem, size = 0x1000, scoped, tag = 'input window, operand 0, single buffered']
    #allocation3 [shape = 's32[2]{0}', space=sflag, size = 0x8, scoped, tag = 'scoped memory for final_conv.1']
    #allocation4 [shape = 'u8[512]{0}', space=smem, size = 0x200, scoped, tag = 'input window, operand 1, single buffered']
    #allocation5 [shape = 's32[1]{0}', space=sflag, size = 0x4, scoped, tag = 'scoped memory for final_conv.1']
    %8 = vsyncpa [#allocation3], 0
    %9 = vsyncpa [#allocation5], 0
    loop: start=0, step=1, limit=4
    $region2: #{final_conv.1} parent=1 // loop_pre_header
      _
    $region3: #{final_conv.1} parent=1 // loop_header
      %s11 = sphi 0, %s15
      %p12 = scmp.ge.s32.totalorder %s11, 4
      %s18 = sphi 0, %s30
      %s19 = sphi 0, %s26
      %s20 = sphi 0, %s18
      %s21 = sphi 0, %s19
      %s22 = sphi 0, %s20
      %s23 = sphi 0, %s21
      %s31 = sphi 0, %s31
      %s33 = sphi 0, %s31
      %s34 = sphi 0, %s33
      %s48 = sphi 0, %s34
      %s52 = sphi 0, %s52
      %s54 = sphi 0, %s52
      %s55 = sphi 0, %s54
      %s69 = sphi 0, %s55
      %s77 = sphi 0, %s79
      %s80 = sphi 0, %s77
      %s81 = sphi 0, %s80
      %s97 = sphi 0, %s81
      %s105 = sphi 0, %s107
      %s108 = sphi 0, %s105
      %s109 = sphi 0, %s108
      %s125 = sphi 0, %s109
    $region4: #{final_conv.1} parent=1 // loop_header_branch
      %14 = sbr.rel (%p12) target = $region8
    $region5: #{final_conv.1} parent=1 // loop_body
      %s16 = ssub.s32 %s11, 1
      %s17 = ssub.s32 %s11, 2
      %s24 = sadd.s32 1, %s19
      %p25 = scmp.ge.s32.totalorder %s24, 1
      %s26 = scalar_select %p25, 0, %s24
      %s27 = sadd.s32 1, %s18
      %s28 = scalar_select %p25, %s27, %s18
      %p29 = scmp.ge.s32.totalorder %s28, 2
      %s30 = scalar_select %p29, 0, %s28
      %s32 = sadd.s32 %s31, 1
      %p35 = scmp.eq.s32.totalorder %s11, 1
      %p36 = scmp.ne.s32.totalorder %s31, %s33
      %p37 = scmp.eq.s32.totalorder %s11, 0
      %p38 = por %p36, %p37
      %p39 = scmp.ne.s32.totalorder %s31, %s33
      %p40 = scmp.eq.s32.totalorder %s16, 1
      %p41 = por %p39, %p40
      %p42 = scmp.ne.s32.totalorder %s33, %s34
      %p43 = scmp.eq.s32.totalorder %s16, 0
      %p44 = por %p42, %p43
      %p45 = scmp.ne.s32.totalorder %s33, %s34
      %p46 = scmp.eq.s32.totalorder %s17, 1
      %p47 = por %p45, %p46
      %p49 = scmp.ne.s32.totalorder %s34, %s48
      %p50 = scmp.eq.s32.totalorder %s17, 0
      %p51 = por %p49, %p50
      %s53 = sadd.s32 %s52, 1
      %p56 = scmp.eq.s32.totalorder %s11, 1
      %p57 = scmp.ne.s32.totalorder %s52, %s54
      %p58 = scmp.eq.s32.totalorder %s11, 0
      %p59 = por %p57, %p58
      %p60 = scmp.ne.s32.totalorder %s52, %s54
      %p61 = scmp.eq.s32.totalorder %s16, 1
      %p62 = por %p60, %p61
      %p63 = scmp.ne.s32.totalorder %s54, %s55
      %p64 = scmp.eq.s32.totalorder %s16, 0
      %p65 = por %p63, %p64
      %p66 = scmp.ne.s32.totalorder %s54, %s55
      %p67 = scmp.eq.s32.totalorder %s17, 1
      %p68 = por %p66, %p67
      %p70 = scmp.ne.s32.totalorder %s55, %s69
      %p71 = scmp.eq.s32.totalorder %s17, 0
      %p72 = por %p70, %p71
      %s73 = ssub.s32 %s18, %s30
      %s74 = ssub.s32 %s19, %s26
      %s75 = sor.u32 %s73, %s74
      %p76 = scmp.eq.s32.totalorder %s75, 0
      %s78 = sadd.s32 %s77, 1
      %s79 = scalar_select %p76, %s77, %s78
      %p82 = pneg %p76
      %p83 = scmp.eq.s32.totalorder %s11, 1
      %p84 = por %p82, %p83
      %p85 = scmp.ne.s32.totalorder %s77, %s80
      %p86 = scmp.eq.s32.totalorder %s11, 0
      %p87 = por %p85, %p86
      %p88 = scmp.ne.s32.totalorder %s77, %s80
      %p89 = scmp.eq.s32.totalorder %s16, 1
      %p90 = por %p88, %p89
      %p91 = scmp.ne.s32.totalorder %s80, %s81
      %p92 = scmp.eq.s32.totalorder %s16, 0
      %p93 = por %p91, %p92
      %p94 = scmp.ne.s32.totalorder %s80, %s81
      %p95 = scmp.eq.s32.totalorder %s17, 1
      %p96 = por %p94, %p95
      %p98 = scmp.ne.s32.totalorder %s81, %s97
      %p99 = scmp.eq.s32.totalorder %s17, 0
      %p100 = por %p98, %p99
      %s101 = ssub.s32 %s18, %s30
      %s102 = ssub.s32 %s19, %s26
      %s103 = sor.u32 %s101, %s102
      %p104 = scmp.eq.s32.totalorder %s103, 0
      %s106 = sadd.s32 %s105, 1
      %s107 = scalar_select %p104, %s105, %s106
      %p110 = pneg %p104
      %p111 = scmp.eq.s32.totalorder %s11, 1
      %p112 = por %p110, %p111
      %p113 = scmp.ne.s32.totalorder %s105, %s108
      %p114 = scmp.eq.s32.totalorder %s11, 0
      %p115 = por %p113, %p114
      %p116 = scmp.ne.s32.totalorder %s105, %s108
      %p117 = scmp.eq.s32.totalorder %s16, 1
      %p118 = por %p116, %p117
      %p119 = scmp.ne.s32.totalorder %s108, %s109
      %p120 = scmp.eq.s32.totalorder %s16, 0
      %p121 = por %p119, %p120
      %p122 = scmp.ne.s32.totalorder %s108, %s109
      %p123 = scmp.eq.s32.totalorder %s17, 1
      %p124 = por %p122, %p123
      %p126 = scmp.ne.s32.totalorder %s109, %s125
      %p127 = scmp.eq.s32.totalorder %s17, 0
      %p128 = por %p126, %p127
      %p129 = scmp.le.s32.totalorder 1, %s11
      %p130 = scmp.lt.s32.totalorder %s11, 3
      %p131 = pnand %p129, %p130
      %p132 = pneg %p131
      // Predicated region
      $region9: #{final_conv.1} parent=5 // pred_check
        _
      $region10: #{final_conv.1} parent=5 // pred_check_branch
        %134 = sbr.rel (%p131) target = $region12
      $region11: #{final_conv.1} parent=5 // pred_region
        %s135 = ssub.s32 %s11, 1
        // Predicated region
        $region13: #{final_conv.1} parent=11 // pred_check
          %p136 = pneg %p44
        $region14: #{final_conv.1} parent=11 // pred_check_branch
          %138 = sbr.rel (%p136) target = $region16
        $region15: #{final_conv.1} parent=11 // pred_region
          %s140 = ssub.s32 128, 128
          %141 = vsyncadd [#allocation3], %s140
          %s143 = sshll.u32 %s0, 4
          %s144 = int_to_ptr.vmem [resolvable:$true] %s143
          %146 = dma.vmem_to_smem %s144, 128, [#allocation2], [#allocation3]
        $region16: #{final_conv.1} parent=11 // pred_fallthru
          _
        // Predicated region
        $region17: #{final_conv.1} parent=11 // pred_check
          %p147 = pneg %p65
        $region18: #{final_conv.1} parent=11 // pred_check_branch
          %149 = sbr.rel (%p147) target = $region20
        $region19: #{final_conv.1} parent=11 // pred_region
          %s151 = ssub.s32 16, 16
          %152 = vsyncadd [#allocation5], %s151
          %s154 = sshll.u32 %s1, 4
          %s155 = int_to_ptr.vmem [resolvable:$true] %s154
          %157 = dma.vmem_to_smem %s155, 16, [#allocation4], [#allocation5]
        $region20: #{final_conv.1} parent=11 // pred_fallthru
          _
      $region12: #{final_conv.1} parent=5 // pred_fallthru
        _
      %p158 = scmp.lt.s32.totalorder %s11, 2
      // Predicated region
      $region21: #{final_conv.1} parent=5 // pred_check
        %p159 = pneg %p158
      $region22: #{final_conv.1} parent=5 // pred_check_branch
        %161 = sbr.rel (%p159) target = $region24
      $region23: #{final_conv.1} parent=5 // pred_region
        // Predicated region
        $region25: #{final_conv.1} parent=23 // pred_check
          %p162 = pneg %p87
        $region26: #{final_conv.1} parent=23 // pred_check_branch
          %164 = sbr.rel (%p162) target = $region28
        $region27: #{final_conv.1} parent=23 // pred_region
          %p165 = scmp.lt.s32.totalorder %s18, 1
          %s166 = scalar_select %p165, %s18, 1
          %p167 = scmp.lt.s32.totalorder %s19, 0
          %s168 = scalar_select %p167, %s19, 0
          %s169 = smul.addr %s166, 4
          %s170 = sadd.s32 %s168, %s169
          %s171 = smul.addr %s170, 2
          %s172 = scalar_lea.vmem %s2, %s171
        $region28: #{final_conv.1} parent=23 // pred_fallthru
          _
      $region24: #{final_conv.1} parent=5 // pred_fallthru
        _
      %p173 = scmp.le.s32.totalorder 1, %s11
      %p174 = scmp.lt.s32.totalorder %s11, 3
      %p175 = pnand %p173, %p174
      %p176 = pneg %p175
      // Predicated region
      $region29: #{final_conv.1} parent=5 // pred_check
        _
      $region30: #{final_conv.1} parent=5 // pred_check_branch
        %178 = sbr.rel (%p175) target = $region32
      $region31: #{final_conv.1} parent=5 // pred_region
        %s179 = ssub.s32 %s11, 1
        // Predicated region
        $region33: #{final_conv.1} parent=31 // pred_check
          %p180 = pneg %p44
        $region34: #{final_conv.1} parent=31 // pred_check_branch
          %182 = sbr.rel (%p180) target = $region36
        $region35: #{final_conv.1} parent=31 // pred_region
          %183 = dma.done [#allocation3], 128
        $region36: #{final_conv.1} parent=31 // pred_fallthru
          _
        // Predicated region
        $region37: #{final_conv.1} parent=31 // pred_check
          %p184 = pneg %p65
        $region38: #{final_conv.1} parent=31 // pred_check_branch
          %186 = sbr.rel (%p184) target = $region40
        $region39: #{final_conv.1} parent=31 // pred_region
          %187 = dma.done [#allocation5], 16
        $region40: #{final_conv.1} parent=31 // pred_fallthru
          _
        %188 = sfence
        %p189 = pneg %p44
        %p190 = pneg %p41
        %p191 = pneg %p65
        %p192 = pneg %p62
        %p193 = scmp.lt.s32.totalorder %s20, 1
        %s194 = scalar_select %p193, %s20, 1
        %p195 = scmp.lt.s32.totalorder %s21, 0
        %s196 = scalar_select %p195, %s21, 0
        %s197 = smul.addr %s194, 4
        %s198 = sadd.s32 %s196, %s197
        %s199 = smul.addr %s198, 2
        %s200 = scalar_lea.vmem %s2, %s199
        %p201 = pneg %p93
        %p202 = pneg %p90
        %p203 = pneg %p121
        %p204 = pneg %p118
        %p205 = scmp.lt.s32.totalorder %s20, 1
        %s206 = scalar_select %p205, %s20, 1
        %p207 = scmp.lt.s32.totalorder %s21, 0
        %s208 = scalar_select %p207, %s21, 0
        %s209 = smul.addr %s206, 5
        %s210 = sadd.s32 %s208, %s209
        %s211 = smul.addr %s210, 2
        %s212 = scalar_lea.vmem %s3, %s211
        %p213 = scmp.lt.s32.totalorder %s20, 1
        %s214 = scalar_select %p213, %s20, 1
        %p215 = scmp.lt.s32.totalorder %s21, 0
        %s216 = scalar_select %p215, %s21, 0
        %s217 = smul.addr %s214, 4
        %s218 = sadd.s32 %s216, %s217
        %s219 = smul.addr %s218, 2
        %s220 = scalar_lea.vmem %s2, %s219
        %p221 = scmp.lt.s32.totalorder %s20, 1
        %s222 = scalar_select %p221, %s20, 1
        %p223 = scmp.lt.s32.totalorder %s21, 0
        %s224 = scalar_select %p223, %s21, 0
        %s225 = smul.addr %s222, 5
        %s226 = sadd.s32 %s224, %s225
        %s227 = smul.addr %s226, 2
        %s228 = scalar_lea.vmem %s3, %s227
        %v229 = vld [vmem:[%s220] sm:$0x3]
        %v230 = vld [vmem:[%s220 + $0x2] sm:$0x3]
        %v231 = vld [vmem:[%s220 + $0x4] sm:$0x3]
        %v232 = vld [vmem:[%s220 + $0x6] sm:$0x3]
        %s233 = sld [smem:[#allocation2]]
        %v234 = vstv %s233
        %v235 = vmul.f32 %v229, %v234
        %s236 = sld [smem:[#allocation2 + $0x1]]
        %v237 = vstv %s236
        %v238 = vmul.f32 %v230, %v237
        %v239 = vadd.f32 %v235, %v238
        %s240 = sld [smem:[#allocation2 + $0x2]]
        %v241 = vstv %s240
        %v242 = vmul.f32 %v231, %v241
        %v243 = vadd.f32 %v239, %v242
        %s244 = sld [smem:[#allocation2 + $0x3]]
        %v245 = vstv %s244
        %v246 = vmul.f32 %v232, %v245
        %v247 = vadd.f32 %v243, %v246
        %s248 = sld [smem:[#allocation4]]
        %v249 = vstv %s248
        %v250 = vadd.f32 %v247, %v249
        %251 = vst [vmem:[%s228] sm:$0x3] %v250
        %s252 = sld [smem:[#allocation2 + $0x80]]
        %v253 = vstv %s252
        %v254 = vmul.f32 %v229, %v253
        %s255 = sld [smem:[#allocation2 + $0x81]]
        %v256 = vstv %s255
        %v257 = vmul.f32 %v230, %v256
        %v258 = vadd.f32 %v254, %v257
        %s259 = sld [smem:[#allocation2 + $0x82]]
        %v260 = vstv %s259
        %v261 = vmul.f32 %v231, %v260
        %v262 = vadd.f32 %v258, %v261
        %s263 = sld [smem:[#allocation2 + $0x83]]
        %v264 = vstv %s263
        %v265 = vmul.f32 %v232, %v264
        %v266 = vadd.f32 %v262, %v265
        %s267 = sld [smem:[#allocation4 + $0x1]]
        %v268 = vstv %s267
        %v269 = vadd.f32 %v266, %v268
        %s270 = scalar_lea.vmem %s228, 2
        %271 = vst [vmem:[%s270] sm:$0x3] %v269
        %s272 = sld [smem:[#allocation2 + $0x100]]
        %v273 = vstv %s272
        %v274 = vmul.f32 %v229, %v273
        %s275 = sld [smem:[#allocation2 + $0x101]]
        %v276 = vstv %s275
        %v277 = vmul.f32 %v230, %v276
        %v278 = vadd.f32 %v274, %v277
        %s279 = sld [smem:[#allocation2 + $0x102]]
        %v280 = vstv %s279
        %v281 = vmul.f32 %v231, %v280
        %v282 = vadd.f32 %v278, %v281
        %s283 = sld [smem:[#allocation2 + $0x103]]
        %v284 = vstv %s283
        %v285 = vmul.f32 %v232, %v284
        %v286 = vadd.f32 %v282, %v285
        %s287 = sld [smem:[#allocation4 + $0x2]]
        %v288 = vstv %s287
        %v289 = vadd.f32 %v286, %v288
        %s290 = scalar_lea.vmem %s228, 4
        %291 = vst [vmem:[%s290] sm:$0x3] %v289
        %s292 = sld [smem:[#allocation2 + $0x180]]
        %v293 = vstv %s292
        %v294 = vmul.f32 %v229, %v293
        %s295 = sld [smem:[#allocation2 + $0x181]]
        %v296 = vstv %s295
        %v297 = vmul.f32 %v230, %v296
        %v298 = vadd.f32 %v294, %v297
        %s299 = sld [smem:[#allocation2 + $0x182]]
        %v300 = vstv %s299
        %v301 = vmul.f32 %v231, %v300
        %v302 = vadd.f32 %v298, %v301
        %s303 = sld [smem:[#allocation2 + $0x183]]
        %v304 = vstv %s303
        %v305 = vmul.f32 %v232, %v304
        %v306 = vadd.f32 %v302, %v305
        %s307 = sld [smem:[#allocation4 + $0x3]]
        %v308 = vstv %s307
        %v309 = vadd.f32 %v306, %v308
        %s310 = scalar_lea.vmem %s228, 6
        %311 = vst [vmem:[%s310] sm:$0x3] %v309
        %s312 = sld [smem:[#allocation2 + $0x200]]
        %v313 = vstv %s312
        %v314 = vmul.f32 %v229, %v313
        %s315 = sld [smem:[#allocation2 + $0x201]]
        %v316 = vstv %s315
        %v317 = vmul.f32 %v230, %v316
        %v318 = vadd.f32 %v314, %v317
        %s319 = sld [smem:[#allocation2 + $0x202]]
        %v320 = vstv %s319
        %v321 = vmul.f32 %v231, %v320
        %v322 = vadd.f32 %v318, %v321
        %s323 = sld [smem:[#allocation2 + $0x203]]
        %v324 = vstv %s323
        %v325 = vmul.f32 %v232, %v324
        %v326 = vadd.f32 %v322, %v325
        %s327 = sld [smem:[#allocation4 + $0x4]]
        %v328 = vstv %s327
        %v329 = vadd.f32 %v326, %v328
        %s330 = scalar_lea.vmem %s228, 8
        %331 = vst [vmem:[%s330] sm:$0x3] %v329
        %p332 = scmp.lt.s32.totalorder %s20, 1
        %s333 = scalar_select %p332, %s20, 1
        %p334 = scmp.lt.s32.totalorder %s21, 0
        %s335 = scalar_select %p334, %s21, 0
        %s336 = smul.addr %s333, 5
        %s337 = sadd.s32 %s335, %s336
        %s338 = smul.addr %s337, 2
        %s339 = scalar_lea.vmem %s3, %s338
        // Predicated region
        $region41: #{final_conv.1} parent=31 // pred_check
          %p340 = pneg %p118
        $region42: #{final_conv.1} parent=31 // pred_check_branch
          %342 = sbr.rel (%p340) target = $region44
        $region43: #{final_conv.1} parent=31 // pred_region
          _
        $region44: #{final_conv.1} parent=31 // pred_fallthru
          _
      $region32: #{final_conv.1} parent=5 // pred_fallthru
        _
      %p343 = scmp.le.s32.totalorder 2, %s11
      // Predicated region
      $region45: #{final_conv.1} parent=5 // pred_check
        %p344 = pneg %p343
      $region46: #{final_conv.1} parent=5 // pred_check_branch
        %346 = sbr.rel (%p344) target = $region48
      $region47: #{final_conv.1} parent=5 // pred_region
        %s347 = ssub.s32 %s11, 2
        // Predicated region
        $region49: #{final_conv.1} parent=47 // pred_check
          %p348 = pneg %p124
        $region50: #{final_conv.1} parent=47 // pred_check_branch
          %350 = sbr.rel (%p348) target = $region52
        $region51: #{final_conv.1} parent=47 // pred_region
          %p351 = scmp.lt.s32.totalorder %s22, 1
          %s352 = scalar_select %p351, %s22, 1
          %p353 = scmp.lt.s32.totalorder %s23, 0
          %s354 = scalar_select %p353, %s23, 0
          %s355 = smul.addr %s352, 5
          %s356 = sadd.s32 %s354, %s355
          %s357 = smul.addr %s356, 2
          %s358 = scalar_lea.vmem %s3, %s357
        $region52: #{final_conv.1} parent=47 // pred_fallthru
          _
      $region48: #{final_conv.1} parent=5 // pred_fallthru
        _
    $region6: #{final_conv.1} parent=1 // loop_footer
      %s15 = sadd.s32 1, %s11
    $region7: #{final_conv.1} parent=1 // loop_footer_branch
      %10 = sbr.rel target = $region3
    $region8: #{final_conv.1} parent=1 // loop_exit
      _
    %359 = vsyncpa [#allocation3], 1
    %s360 = scalar_lea.sflag [#allocation3], 1
    %361 = vsyncpa %s360, 1
    %362 = vsyncpa [#allocation5], 1

</llo_original>
